<compile_context>
chip_gen: v5e
topology: v5e:2x2
jax: 0.10.0
libtpu: 0.0.40
codegen_flags: <defaults>
</compile_context>

<pallas_src>
import functools
import math

import jax
import jax.numpy as jnp
from jax.experimental import pallas as pl
from jax.experimental.pallas import tpu as pltpu

# MXU operand dtype. bf16 gives ~4x MXU throughput on v6e/v7x and is the native
# MXU input on v5e; accumulation is always f32 (preferred_element_type).
_MATMUL_DTYPE = jnp.bfloat16

# Finite "-inf": masked entries get exp(...) == 0; fully-masked rows yield a
# uniform 1/Sk distribution instead of PyTorch's NaN (documented difference).
_MASK_VALUE = -1e30


# --------------------------------- kernel ------------------------------------ #

def _mha_kernel(*refs, heads, scale, q_mode, mask_mode, q_tile):
    """Fused MHA forward for one (batch, q-tile) grid point.

    q_mode:    "fused_qkv" (Q=K=V, untiled) | "q_kv" (K=V) | "q_k_v" (general)
    mask_mode: "dense" (additive bias ref) | "causal" (iota in-kernel) | "none"
    """
    if q_mode == "fused_qkv":
        x_ref, wqkv_ref, wo_ref = refs[0], refs[1], refs[2]
        rest = refs[3:]
    elif q_mode == "q_kv":
        xq_ref, xkv_ref, wqkv_ref, wo_ref = refs[0], refs[1], refs[2], refs[3]
        rest = refs[4:]
    else:  # "q_k_v"
        xq_ref, xk_ref, xv_ref, wqkv_ref, wo_ref = refs[:5]
        rest = refs[5:]
    if mask_mode == "dense":
        bias_ref, o_ref = rest
    else:
        (o_ref,) = rest

    D = wqkv_ref.shape[0]
    dk = D // heads
    wqkv = wqkv_ref[...].astype(_MATMUL_DTYPE)  # no-op cast: params stored in bf16

    # ---- projections: bf16 MXU operands, f32 accumulation --------------------
    if q_mode == "fused_qkv":
        x = x_ref[0].astype(_MATMUL_DTYPE)                               # (Sq, D)
        qkv = jnp.dot(x, wqkv, preferred_element_type=jnp.float32)       # (Sq, 3D)
        q, k, v = qkv[:, :D], qkv[:, D:2 * D], qkv[:, 2 * D:]
    elif q_mode == "q_kv":
        q = jnp.dot(xq_ref[0].astype(_MATMUL_DTYPE), wqkv[:, :D],
                    preferred_element_type=jnp.float32)                  # (tq, D)
        kv = jnp.dot(xkv_ref[0].astype(_MATMUL_DTYPE), wqkv[:, D:],
                     preferred_element_type=jnp.float32)                 # (Sk, 2D)
        k, v = kv[:, :D], kv[:, D:]
    else:
        q = jnp.dot(xq_ref[0].astype(_MATMUL_DTYPE), wqkv[:, :D],
                    preferred_element_type=jnp.float32)
        k = jnp.dot(xk_ref[0].astype(_MATMUL_DTYPE), wqkv[:, D:2 * D],
                    preferred_element_type=jnp.float32)
        v = jnp.dot(xv_ref[0].astype(_MATMUL_DTYPE), wqkv[:, 2 * D:],
                    preferred_element_type=jnp.float32)

    Sq_t, Sk = q.shape[0], k.shape[0]

    # ---- additive mask bias ---------------------------------------------------
    if mask_mode == "dense":
        bias = bias_ref[...]                                             # (tq, Sk)
    elif mask_mode == "causal":
        row0 = pl.program_id(1) * q_tile
        rows = jax.lax.broadcasted_iota(jnp.int32, (Sq_t, Sk), 0) + row0
        cols = jax.lax.broadcasted_iota(jnp.int32, (Sq_t, Sk), 1)
        bias = jnp.where(cols > rows, jnp.float32(_MASK_VALUE), jnp.float32(0.0))
    else:
        bias = None

    # ---- per-head SDPA (static unroll over heads; everything stays in VMEM) ---
    head_outs = []
    for h in range(heads):
        lo = h * dk
        # Scale folded into the (tq, dk) query slice, not the (tq, Sk) scores.
        qh = (q[:, lo:lo + dk] * scale).astype(_MATMUL_DTYPE)
        kh = k[:, lo:lo + dk].astype(_MATMUL_DTYPE)
        vh = v[:, lo:lo + dk].astype(_MATMUL_DTYPE)
        s = jax.lax.dot_general(qh, kh, (((1,), (1,)), ((), ())),
                                preferred_element_type=jnp.float32)      # (tq, Sk)
        if bias is not None:
            s = s + bias
        m = jnp.max(s, axis=-1, keepdims=True)
        p = jnp.exp(s - m)
        l = jnp.sum(p, axis=-1, keepdims=True)
        a_h = jnp.dot(p.astype(_MATMUL_DTYPE), vh,
                      preferred_element_type=jnp.float32)                # (tq, dk)
        # Deferred normalization: (tq, dk) multiply instead of a (tq, Sk) pass;
        # reciprocal goes to the EUP slot (free).
        head_outs.append(a_h * pl.reciprocal(l, approx=True))

    # Head-concat accumulator + single full-depth W_O matmul (K = D contraction).
    concat = jnp.concatenate(head_outs, axis=-1)                         # (tq, D)
    out = jnp.dot(concat.astype(_MATMUL_DTYPE), wo_ref[...].astype(_MATMUL_DTYPE),
                  preferred_element_type=jnp.float32)
    o_ref[0] = out.astype(o_ref.dtype)


# -------------------------------- wrappers ------------------------------------ #

def _mask_to_bias(mask):
    # torch semantics: mask == True -> masked_fill_(-inf) before softmax.
    return jnp.where(mask, jnp.float32(_MASK_VALUE), jnp.float32(0.0))


def multi_head_attention(Q, K, V, mask, params, *, heads,
                         q_tile=None, vmem_limit_bytes=None):
    """MultiHeadAttention.forward(Q, K, V, mask) as one fused pallas_call.

    mask: None | "causal" | bool array of shape (Sq, Sk) (True == masked),
          shared across the batch (matches the original usage).
    q_tile: optional Sq tile size (must divide Sq, multiple of 8).
    """
    B, Sq, D = Q.shape
    Sk = K.shape[1]
    assert D % heads == 0
    dk = D // heads
    scale = 1.0 / math.sqrt(dk)
    tq = Sq if q_tile is None else int(q_tile)
    assert Sq % tq == 0
    nq = Sq // tq

    kv_same = K is V
    self_attn = (Q is K) and kv_same
    if self_attn and tq == Sq:
        q_mode = "fused_qkv"     # single (S, D) @ (D, 3D) projection matmul
    elif kv_same:
        q_mode = "q_kv"          # fused K|V projection: (Sk, D) @ (D, 2D)
    else:
        q_mode = "q_k_v"

    if mask is None:
        mask_mode = "none"
    elif isinstance(mask, str):
        assert mask == "causal", mask
        mask_mode = "causal"
    else:
        assert mask.shape == (Sq, Sk), mask.shape
        mask_mode = "dense"

    operands, in_specs = [], []
    if q_mode == "fused_qkv":
        operands += [Q]
        in_specs += [pl.BlockSpec((1, Sq, D), lambda b, i: (b, 0, 0))]
    elif q_mode == "q_kv":
        operands += [Q, K]
        in_specs += [pl.BlockSpec((1, tq, D), lambda b, i: (b, i, 0)),
                     pl.BlockSpec((1, Sk, D), lambda b, i: (b, 0, 0))]
    else:
        operands += [Q, K, V]
        in_specs += [pl.BlockSpec((1, tq, D), lambda b, i: (b, i, 0)),
                     pl.BlockSpec((1, Sk, D), lambda b, i: (b, 0, 0)),
                     pl.BlockSpec((1, Sk, D), lambda b, i: (b, 0, 0))]

    # Grid-invariant weights (same block index for every grid point).
    operands += [params["wqkv"], params["wo"]]
    in_specs += [pl.BlockSpec((D, 3 * D), lambda b, i: (0, 0)),
                 pl.BlockSpec((D, D), lambda b, i: (0, 0))]

    if mask_mode == "dense":
        operands += [_mask_to_bias(mask)]
        in_specs += [pl.BlockSpec((tq, Sk), lambda b, i: (i, 0))]

    kernel = functools.partial(_mha_kernel, heads=heads, scale=scale,
                               q_mode=q_mode, mask_mode=mask_mode, q_tile=tq)
    return pl.pallas_call(
        kernel,
        out_shape=jax.ShapeDtypeStruct((B, Sq, D), Q.dtype),
        grid=(B, nq),
        in_specs=in_specs,
        out_specs=pl.BlockSpec((1, tq, D), lambda b, i: (b, i, 0)),
        compiler_params=pltpu.CompilerParams(
            dimension_semantics=("parallel", "parallel"),
            vmem_limit_bytes=vmem_limit_bytes),
    )(*operands)


def multi_head_self_attention(x, mask, params, *, heads,
                              q_tile=None, vmem_limit_bytes=None):
    """MultiHeadAttention.forward(x, x, x, mask) (fused QKV / fused KV paths)."""
    return multi_head_attention(x, x, x, mask, params, heads=heads,
                                q_tile=q_tile, vmem_limit_bytes=vmem_limit_bytes)


# ---------------------------- reference & params ------------------------------ #

def mha_reference(Q, K, V, mask, params, heads):
    """Pure-JAX f32 mirror of the PyTorch module (weights upcast from params)."""
    D = Q.shape[-1]
    dk = D // heads
    wqkv = params["wqkv"].astype(jnp.float32)
    wo = params["wo"].astype(jnp.float32)
    wq, wk, wv = wqkv[:, :D], wqkv[:, D:2 * D], wqkv[:, 2 * D:]
    q, k, v = Q @ wq, K @ wk, V @ wv
    B, Sq, _ = q.shape
    Sk = k.shape[1]
    qh = q.reshape(B, Sq, heads, dk).transpose(0, 2, 1, 3)
    kh = k.reshape(B, Sk, heads, dk).transpose(0, 2, 1, 3)
    vh = v.reshape(B, Sk, heads, dk).transpose(0, 2, 1, 3)
    e = jnp.einsum("bhqd,bhkd->bhqk", qh, kh) / math.sqrt(dk)
    if mask is not None:
        e = jnp.where(mask, -jnp.inf, e)
    w = jax.nn.softmax(e, axis=-1)
    a = jnp.einsum("bhqk,bhkd->bhqd", w, vh)
    return (a.transpose(0, 2, 1, 3).reshape(B, Sq, D) @ wo).astype(Q.dtype)


def init_params(key, d_model, dtype=_MATMUL_DTYPE):
    kq, kk, kv, ko = jax.random.split(key, 4)
    s = 1.0 / math.sqrt(d_model)  # nn.Linear(bias=False) default init bound
    wq = jax.random.uniform(kq, (d_model, d_model), jnp.float32, -s, s)
    wk = jax.random.uniform(kk, (d_model, d_model), jnp.float32, -s, s)
    wv = jax.random.uniform(kv, (d_model, d_model), jnp.float32, -s, s)
    wo = jax.random.uniform(ko, (d_model, d_model), jnp.float32, -s, s)
    # Stored fused and in the MXU operand dtype (no per-grid-step cast, half the
    # HBM/VMEM footprint of f32 weights).
    return {"wqkv": jnp.concatenate([wq, wk, wv], axis=1).astype(dtype),
            "wo": wo.astype(dtype)}


# --------------------------------- main --------------------------------------- #

if __name__ == "__main__":
    B, heads, d_model = 2, 4, 32
    S, S_enc = 16, 8   # note: toy shapes are pure pipeline overhead; tune at scale

    key = jax.random.PRNGKey(0)
    k_x, k_enc, k_k, k_v, k_w = jax.random.split(key, 5)
    x = jax.random.normal(k_x, (B, S, d_model), jnp.float32)
    enc = jax.random.normal(k_enc, (B, S_enc, d_model), jnp.float32)
    k_in = jax.random.normal(k_k, (B, S_enc, d_model), jnp.float32)
    v_in = jax.random.normal(k_v, (B, S_enc, d_model), jnp.float32)
    params = init_params(k_w, d_model)

    # True == masked (like the torch bool mask passed to masked_fill_).
    causal_mask = jnp.triu(jnp.ones((S, S), jnp.bool_), k=1)
    pad_mask = jnp.zeros((S, S_enc), jnp.bool_).at[:, 5:].set(True)

    # 1) self-attention, causal mask generated in-kernel, Sq tiled (grid (B, 2)).
    self_causal_fn = jax.jit(lambda a, p: multi_head_self_attention(
        a, "causal", p, heads=heads, q_tile=8))
    # 2) self-attention, dense bool mask, fused-QKV single-matmul path.
    self_dense_fn = jax.jit(lambda a, m, p: multi_head_self_attention(
        a, m, p, heads=heads))
    # 3) cross-attention, K = V (fused KV projection), no mask (no bias DMA).
    cross_fn = jax.jit(lambda q, kv, p: multi_head_attention(
        q, kv, kv, None, p, heads=heads))
    # 4) fully general forward(Q, K, V, mask) with distinct K/V and a dense mask.
    general_fn = jax.jit(lambda q, k, v, m, p: multi_head_attention(
        q, k, v, m, p, heads=heads))

    out_causal = jax.block_until_ready(self_causal_fn(x, params))
    out_dense = jax.block_until_ready(self_dense_fn(x, causal_mask, params))
    out_cross = jax.block_until_ready(cross_fn(x, enc, params))
    out_general = jax.block_until_ready(general_fn(x, k_in, v_in, pad_mask, params))

    ref_self = mha_reference(x, x, x, causal_mask, params, heads)
    ref_cross = mha_reference(x, enc, enc, None, params, heads)
    ref_general = mha_reference(x, k_in, v_in, pad_mask, params, heads)

    # Tolerance covers bf16 MXU operands + approx-reciprocal softmax vs f32 ref.
    tol = dict(atol=2e-2, rtol=2e-2)
    checks = [("self_causal", out_causal, ref_self),
              ("self_dense", out_dense, ref_self),
              ("cross_kv_fused", out_cross, ref_cross),
              ("general", out_general, ref_general)]
    for name, got, ref in checks:
        assert got.shape == ref.shape, (name, got.shape, ref.shape)
        assert bool(jnp.all(jnp.isfinite(got))), name
        err = float(jnp.max(jnp.abs(got - ref)))
        assert bool(jnp.allclose(got, ref, **tol)), (name, err)

    print("KERNEL_OK")
</pallas_src>

<mosaic_0001>
module attributes {stable_mosaic.version = 11 : i64} {
  func.func @_mha_kernel(%arg0: i32, %arg1: i32, %arg2: memref<1x8x32xf32, #tpu.memory_space<vmem>>, %arg3: memref<1x16x32xf32, #tpu.memory_space<vmem>>, %arg4: memref<32x96xbf16, #tpu.memory_space<vmem>>, %arg5: memref<32x32xbf16, #tpu.memory_space<vmem>>, %arg6: memref<1x8x32xf32, #tpu.memory_space<vmem>>) attributes {dimension_semantics = [#tpu.dimension_semantics<parallel>, #tpu.dimension_semantics<parallel>], iteration_bounds = array<i64: 2, 2>, scalar_prefetch = 0 : i64, scratch_operands = 0 : i64, tpu.core_type = #tpu.core_type<tc>, window_params = [{transform_indices = @transform_0, window_bounds = array<i64: 1, 8, 32>}, {transform_indices = @transform_1, window_bounds = array<i64: 1, 16, 32>}, {pipeline_mode = #tpu.pipeline_mode<synchronous>, transform_indices = @transform_2, window_bounds = array<i64: 32, 96>}, {pipeline_mode = #tpu.pipeline_mode<synchronous>, transform_indices = @transform_3, window_bounds = array<i64: 32, 32>}, {transform_indices = @transform_4, window_bounds = array<i64: 1, 8, 32>}]} {
    %c0 = arith.constant 0 : index
    %c0_0 = arith.constant 0 : index
    %0 = vector.load %arg4[%c0, %c0_0] : memref<32x96xbf16, #tpu.memory_space<vmem>>, vector<32x96xbf16>
    %c0_1 = arith.constant 0 : index
    %c0_2 = arith.constant 0 : index
    %c0_3 = arith.constant 0 : index
    %1 = vector.load %arg2[%c0_1, %c0_2, %c0_3] : memref<1x8x32xf32, #tpu.memory_space<vmem>>, vector<1x8x32xf32>
    %2 = vector.shape_cast %1 : vector<1x8x32xf32> to vector<8x32xf32>
    %3 = arith.truncf %2 : vector<8x32xf32> to vector<8x32xbf16>
    %4 = vector.extract_strided_slice %0 {offsets = [0, 0], sizes = [32, 32], strides = [1, 1]} : vector<32x96xbf16> to vector<32x32xbf16>
    %cst = arith.constant dense<0.000000e+00> : vector<8x32xf32>
    %5 = tpu.matmul %3, %4, %cst {dimension_numbers = #tpu.dot_dimension_numbers<[1], [0], [0], [1], [0, 0, 1, 1], [], []>} : vector<8x32xbf16>, vector<32x32xbf16>, vector<8x32xf32> -> vector<8x32xf32>
    %c0_4 = arith.constant 0 : index
    %c0_5 = arith.constant 0 : index
    %c0_6 = arith.constant 0 : index
    %6 = vector.load %arg3[%c0_4, %c0_5, %c0_6] : memref<1x16x32xf32, #tpu.memory_space<vmem>>, vector<1x16x32xf32>
    %7 = vector.shape_cast %6 : vector<1x16x32xf32> to vector<16x32xf32>
    %8 = arith.truncf %7 : vector<16x32xf32> to vector<16x32xbf16>
    %9 = vector.extract_strided_slice %0 {offsets = [0, 32], sizes = [32, 64], strides = [1, 1]} : vector<32x96xbf16> to vector<32x64xbf16>
    %cst_7 = arith.constant dense<0.000000e+00> : vector<16x64xf32>
    %10 = tpu.matmul %8, %9, %cst_7 {dimension_numbers = #tpu.dot_dimension_numbers<[1], [0], [0], [1], [0, 0, 1, 1], [], []>} : vector<16x32xbf16>, vector<32x64xbf16>, vector<16x64xf32> -> vector<16x64xf32>
    %11 = vector.extract_strided_slice %10 {offsets = [0, 0], sizes = [16, 32], strides = [1, 1]} : vector<16x64xf32> to vector<16x32xf32>
    %12 = vector.extract_strided_slice %10 {offsets = [0, 32], sizes = [16, 32], strides = [1, 1]} : vector<16x64xf32> to vector<16x32xf32>
    %c8_i32 = arith.constant 8 : i32
    %13 = arith.muli %arg1, %c8_i32 : i32
    %14 = tpu.iota {dimensions = array<i32: 0>} : vector<8x16xi32>
    %15 = vector.broadcast %13 : i32 to vector<8x16xi32>
    %16 = arith.addi %14, %15 : vector<8x16xi32>
    %17 = tpu.iota {dimensions = array<i32: 1>} : vector<8x16xi32>
    %18 = arith.cmpi sgt, %17, %16 : vector<8x16xi32>
    %cst_8 = arith.constant -1.000000e+30 : f32
    %cst_9 = arith.constant 0.000000e+00 : f32
    %19 = vector.broadcast %cst_8 : f32 to vector<8x16xf32>
    %20 = vector.broadcast %cst_9 : f32 to vector<8x16xf32>
    %21 = arith.select %18, %19, %20 : vector<8x16xi1>, vector<8x16xf32>
    %22 = vector.extract_strided_slice %5 {offsets = [0, 0], sizes = [8, 8], strides = [1, 1]} : vector<8x32xf32> to vector<8x8xf32>
    %cst_10 = arith.constant 0.353553385 : f32
    %23 = vector.broadcast %cst_10 : f32 to vector<8x8xf32>
    %24 = arith.mulf %22, %23 : vector<8x8xf32>
    %25 = arith.truncf %24 : vector<8x8xf32> to vector<8x8xbf16>
    %26 = vector.extract_strided_slice %11 {offsets = [0, 0], sizes = [16, 8], strides = [1, 1]} : vector<16x32xf32> to vector<16x8xf32>
    %27 = arith.truncf %26 : vector<16x8xf32> to vector<16x8xbf16>
    %28 = vector.extract_strided_slice %12 {offsets = [0, 0], sizes = [16, 8], strides = [1, 1]} : vector<16x32xf32> to vector<16x8xf32>
    %29 = arith.truncf %28 : vector<16x8xf32> to vector<16x8xbf16>
    %cst_11 = arith.constant dense<0.000000e+00> : vector<8x16xf32>
    %30 = tpu.matmul %25, %27, %cst_11 {dimension_numbers = #tpu.dot_dimension_numbers<[1], [1], [0], [0], [0, 0, 1, 0], [], []>} : vector<8x8xbf16>, vector<16x8xbf16>, vector<8x16xf32> -> vector<8x16xf32>
    %31 = arith.addf %30, %21 : vector<8x16xf32>
    %cst_12 = arith.constant dense<0xFF800000> : vector<8xf32>
    %32 = vector.multi_reduction <maximumf>, %31, %cst_12 [1] : vector<8x16xf32> to vector<8xf32>
    %33 = vector.shape_cast %32 : vector<8xf32> to vector<8x1xf32>
    %34 = vector.broadcast %33 : vector<8x1xf32> to vector<8x16xf32>
    %35 = arith.subf %31, %34 : vector<8x16xf32>
    %36 = math.exp %35 : vector<8x16xf32>
    %cst_13 = arith.constant dense<0.000000e+00> : vector<8xf32>
    %37 = vector.multi_reduction <add>, %36, %cst_13 [1] : vector<8x16xf32> to vector<8xf32>
    %38 = vector.shape_cast %37 : vector<8xf32> to vector<8x1xf32>
    %39 = arith.truncf %36 : vector<8x16xf32> to vector<8x16xbf16>
    %cst_14 = arith.constant dense<0.000000e+00> : vector<8x8xf32>
    %40 = tpu.matmul %39, %29, %cst_14 {dimension_numbers = #tpu.dot_dimension_numbers<[1], [0], [0], [1], [0, 0, 1, 1], [], []>} : vector<8x16xbf16>, vector<16x8xbf16>, vector<8x8xf32> -> vector<8x8xf32>
    %41 = tpu.reciprocal %38 {approx = true} : vector<8x1xf32> -> vector<8x1xf32>
    %42 = vector.broadcast %41 : vector<8x1xf32> to vector<8x8xf32>
    %43 = arith.mulf %40, %42 : vector<8x8xf32>
    %44 = vector.extract_strided_slice %5 {offsets = [0, 8], sizes = [8, 8], strides = [1, 1]} : vector<8x32xf32> to vector<8x8xf32>
    %cst_15 = arith.constant 0.353553385 : f32
    %45 = vector.broadcast %cst_15 : f32 to vector<8x8xf32>
    %46 = arith.mulf %44, %45 : vector<8x8xf32>
    %47 = arith.truncf %46 : vector<8x8xf32> to vector<8x8xbf16>
    %48 = vector.extract_strided_slice %11 {offsets = [0, 8], sizes = [16, 8], strides = [1, 1]} : vector<16x32xf32> to vector<16x8xf32>
    %49 = arith.truncf %48 : vector<16x8xf32> to vector<16x8xbf16>
    %50 = vector.extract_strided_slice %12 {offsets = [0, 8], sizes = [16, 8], strides = [1, 1]} : vector<16x32xf32> to vector<16x8xf32>
    %51 = arith.truncf %50 : vector<16x8xf32> to vector<16x8xbf16>
    %cst_16 = arith.constant dense<0.000000e+00> : vector<8x16xf32>
    %52 = tpu.matmul %47, %49, %cst_16 {dimension_numbers = #tpu.dot_dimension_numbers<[1], [1], [0], [0], [0, 0, 1, 0], [], []>} : vector<8x8xbf16>, vector<16x8xbf16>, vector<8x16xf32> -> vector<8x16xf32>
    %53 = arith.addf %52, %21 : vector<8x16xf32>
    %cst_17 = arith.constant dense<0xFF800000> : vector<8xf32>
    %54 = vector.multi_reduction <maximumf>, %53, %cst_17 [1] : vector<8x16xf32> to vector<8xf32>
    %55 = vector.shape_cast %54 : vector<8xf32> to vector<8x1xf32>
    %56 = vector.broadcast %55 : vector<8x1xf32> to vector<8x16xf32>
    %57 = arith.subf %53, %56 : vector<8x16xf32>
    %58 = math.exp %57 : vector<8x16xf32>
    %cst_18 = arith.constant dense<0.000000e+00> : vector<8xf32>
    %59 = vector.multi_reduction <add>, %58, %cst_18 [1] : vector<8x16xf32> to vector<8xf32>
    %60 = vector.shape_cast %59 : vector<8xf32> to vector<8x1xf32>
    %61 = arith.truncf %58 : vector<8x16xf32> to vector<8x16xbf16>
    %cst_19 = arith.constant dense<0.000000e+00> : vector<8x8xf32>
    %62 = tpu.matmul %61, %51, %cst_19 {dimension_numbers = #tpu.dot_dimension_numbers<[1], [0], [0], [1], [0, 0, 1, 1], [], []>} : vector<8x16xbf16>, vector<16x8xbf16>, vector<8x8xf32> -> vector<8x8xf32>
    %63 = tpu.reciprocal %60 {approx = true} : vector<8x1xf32> -> vector<8x1xf32>
    %64 = vector.broadcast %63 : vector<8x1xf32> to vector<8x8xf32>
    %65 = arith.mulf %62, %64 : vector<8x8xf32>
    %66 = vector.extract_strided_slice %5 {offsets = [0, 16], sizes = [8, 8], strides = [1, 1]} : vector<8x32xf32> to vector<8x8xf32>
    %cst_20 = arith.constant 0.353553385 : f32
    %67 = vector.broadcast %cst_20 : f32 to vector<8x8xf32>
    %68 = arith.mulf %66, %67 : vector<8x8xf32>
    %69 = arith.truncf %68 : vector<8x8xf32> to vector<8x8xbf16>
    %70 = vector.extract_strided_slice %11 {offsets = [0, 16], sizes = [16, 8], strides = [1, 1]} : vector<16x32xf32> to vector<16x8xf32>
    %71 = arith.truncf %70 : vector<16x8xf32> to vector<16x8xbf16>
    %72 = vector.extract_strided_slice %12 {offsets = [0, 16], sizes = [16, 8], strides = [1, 1]} : vector<16x32xf32> to vector<16x8xf32>
    %73 = arith.truncf %72 : vector<16x8xf32> to vector<16x8xbf16>
    %cst_21 = arith.constant dense<0.000000e+00> : vector<8x16xf32>
    %74 = tpu.matmul %69, %71, %cst_21 {dimension_numbers = #tpu.dot_dimension_numbers<[1], [1], [0], [0], [0, 0, 1, 0], [], []>} : vector<8x8xbf16>, vector<16x8xbf16>, vector<8x16xf32> -> vector<8x16xf32>
    %75 = arith.addf %74, %21 : vector<8x16xf32>
    %cst_22 = arith.constant dense<0xFF800000> : vector<8xf32>
    %76 = vector.multi_reduction <maximumf>, %75, %cst_22 [1] : vector<8x16xf32> to vector<8xf32>
    %77 = vector.shape_cast %76 : vector<8xf32> to vector<8x1xf32>
    %78 = vector.broadcast %77 : vector<8x1xf32> to vector<8x16xf32>
    %79 = arith.subf %75, %78 : vector<8x16xf32>
    %80 = math.exp %79 : vector<8x16xf32>
    %cst_23 = arith.constant dense<0.000000e+00> : vector<8xf32>
    %81 = vector.multi_reduction <add>, %80, %cst_23 [1] : vector<8x16xf32> to vector<8xf32>
    %82 = vector.shape_cast %81 : vector<8xf32> to vector<8x1xf32>
    %83 = arith.truncf %80 : vector<8x16xf32> to vector<8x16xbf16>
    %cst_24 = arith.constant dense<0.000000e+00> : vector<8x8xf32>
    %84 = tpu.matmul %83, %73, %cst_24 {dimension_numbers = #tpu.dot_dimension_numbers<[1], [0], [0], [1], [0, 0, 1, 1], [], []>} : vector<8x16xbf16>, vector<16x8xbf16>, vector<8x8xf32> -> vector<8x8xf32>
    %85 = tpu.reciprocal %82 {approx = true} : vector<8x1xf32> -> vector<8x1xf32>
    %86 = vector.broadcast %85 : vector<8x1xf32> to vector<8x8xf32>
    %87 = arith.mulf %84, %86 : vector<8x8xf32>
    %88 = vector.extract_strided_slice %5 {offsets = [0, 24], sizes = [8, 8], strides = [1, 1]} : vector<8x32xf32> to vector<8x8xf32>
    %cst_25 = arith.constant 0.353553385 : f32
    %89 = vector.broadcast %cst_25 : f32 to vector<8x8xf32>
    %90 = arith.mulf %88, %89 : vector<8x8xf32>
    %91 = arith.truncf %90 : vector<8x8xf32> to vector<8x8xbf16>
    %92 = vector.extract_strided_slice %11 {offsets = [0, 24], sizes = [16, 8], strides = [1, 1]} : vector<16x32xf32> to vector<16x8xf32>
    %93 = arith.truncf %92 : vector<16x8xf32> to vector<16x8xbf16>
    %94 = vector.extract_strided_slice %12 {offsets = [0, 24], sizes = [16, 8], strides = [1, 1]} : vector<16x32xf32> to vector<16x8xf32>
    %95 = arith.truncf %94 : vector<16x8xf32> to vector<16x8xbf16>
    %cst_26 = arith.constant dense<0.000000e+00> : vector<8x16xf32>
    %96 = tpu.matmul %91, %93, %cst_26 {dimension_numbers = #tpu.dot_dimension_numbers<[1], [1], [0], [0], [0, 0, 1, 0], [], []>} : vector<8x8xbf16>, vector<16x8xbf16>, vector<8x16xf32> -> vector<8x16xf32>
    %97 = arith.addf %96, %21 : vector<8x16xf32>
    %cst_27 = arith.constant dense<0xFF800000> : vector<8xf32>
    %98 = vector.multi_reduction <maximumf>, %97, %cst_27 [1] : vector<8x16xf32> to vector<8xf32>
    %99 = vector.shape_cast %98 : vector<8xf32> to vector<8x1xf32>
    %100 = vector.broadcast %99 : vector<8x1xf32> to vector<8x16xf32>
    %101 = arith.subf %97, %100 : vector<8x16xf32>
    %102 = math.exp %101 : vector<8x16xf32>
    %cst_28 = arith.constant dense<0.000000e+00> : vector<8xf32>
    %103 = vector.multi_reduction <add>, %102, %cst_28 [1] : vector<8x16xf32> to vector<8xf32>
    %104 = vector.shape_cast %103 : vector<8xf32> to vector<8x1xf32>
    %105 = arith.truncf %102 : vector<8x16xf32> to vector<8x16xbf16>
    %cst_29 = arith.constant dense<0.000000e+00> : vector<8x8xf32>
    %106 = tpu.matmul %105, %95, %cst_29 {dimension_numbers = #tpu.dot_dimension_numbers<[1], [0], [0], [1], [0, 0, 1, 1], [], []>} : vector<8x16xbf16>, vector<16x8xbf16>, vector<8x8xf32> -> vector<8x8xf32>
    %107 = tpu.reciprocal %104 {approx = true} : vector<8x1xf32> -> vector<8x1xf32>
    %108 = vector.broadcast %107 : vector<8x1xf32> to vector<8x8xf32>
    %109 = arith.mulf %106, %108 : vector<8x8xf32>
    %110 = tpu.concatenate %43, %65, %87, %109 in 1 : vector<8x8xf32>, vector<8x8xf32>, vector<8x8xf32>, vector<8x8xf32> -> vector<8x32xf32>
    %111 = arith.truncf %110 : vector<8x32xf32> to vector<8x32xbf16>
    %c0_30 = arith.constant 0 : index
    %c0_31 = arith.constant 0 : index
    %112 = vector.load %arg5[%c0_30, %c0_31] : memref<32x32xbf16, #tpu.memory_space<vmem>>, vector<32x32xbf16>
    %cst_32 = arith.constant dense<0.000000e+00> : vector<8x32xf32>
    %113 = tpu.matmul %111, %112, %cst_32 {dimension_numbers = #tpu.dot_dimension_numbers<[1], [0], [0], [1], [0, 0, 1, 1], [], []>} : vector<8x32xbf16>, vector<32x32xbf16>, vector<8x32xf32> -> vector<8x32xf32>
    %c0_33 = arith.constant 0 : index
    %c0_34 = arith.constant 0 : index
    %c0_35 = arith.constant 0 : index
    %114 = vector.load %arg6[%c0_33, %c0_34, %c0_35] : memref<1x8x32xf32, #tpu.memory_space<vmem>>, vector<1x8x32xf32>
    %115 = vector.shape_cast %114 : vector<1x8x32xf32> to vector<8x32xf32>
    %116 = vector.shape_cast %113 : vector<8x32xf32> to vector<1x8x32xf32>
    tpu.vector_store %arg6[%c0_33, %c0_34, %c0_35], %116 {strides = array<i32>} : memref<1x8x32xf32, #tpu.memory_space<vmem>>, vector<1x8x32xf32>,
    return
  }
  func.func @transform_0(%arg0: i32, %arg1: i32) -> (i32, i32, i32) {
    %c0_i32 = arith.constant 0 : i32
    %c0_i32_0 = arith.constant 0 : i32
    return %arg0, %arg1, %c0_i32 : i32, i32, i32
  }
  func.func @transform_1(%arg0: i32, %arg1: i32) -> (i32, i32, i32) {
    %c0_i32 = arith.constant 0 : i32
    %c0_i32_0 = arith.constant 0 : i32
    %c0_i32_1 = arith.constant 0 : i32
    return %arg0, %c0_i32, %c0_i32_0 : i32, i32, i32
  }
  func.func @transform_2(%arg0: i32, %arg1: i32) -> (i32, i32) {
    %c0_i32 = arith.constant 0 : i32
    %c0_i32_0 = arith.constant 0 : i32
    %c0_i32_1 = arith.constant 0 : i32
    return %c0_i32, %c0_i32_0 : i32, i32
  }
  func.func @transform_3(%arg0: i32, %arg1: i32) -> (i32, i32) {
    %c0_i32 = arith.constant 0 : i32
    %c0_i32_0 = arith.constant 0 : i32
    %c0_i32_1 = arith.constant 0 : i32
    return %c0_i32, %c0_i32_0 : i32, i32
  }
  func.func @transform_4(%arg0: i32, %arg1: i32) -> (i32, i32, i32) {
    %c0_i32 = arith.constant 0 : i32
    %c0_i32_0 = arith.constant 0 : i32
    return %arg0, %arg1, %c0_i32 : i32, i32, i32
  }
}

</mosaic_0001>

<llo_original>
// kernel: _lambda_.1
$region0: #{_lambda_.1}
  #allocation0 [shape = 'u32[]', space=smem, size = 0x4, offset = 0x4, fixed_abs, tag = 'smem constant byte address 0x4 - core index']
  #allocation1 [shape = 'u32[72,128]{1,0:T(1,128)}', space=vmem, size = 0x9000, scoped, tag = 'internal scratch']
  %s0 = inlined_call_operand.hbm [shape: f32[2,16,32], index: 0, kind: input, shape index: {}, may-alias: {0,1}]
  %s1 = inlined_call_operand.hbm [shape: f32[2,16,32], index: 1, kind: input, shape index: {}, may-alias: {0,1}]
  %s2 = inlined_call_operand.hbm [shape: bf16[32,96], index: 2, kind: input, shape index: {}]
  %s3 = inlined_call_operand.hbm [shape: bf16[32,32], index: 3, kind: input, shape index: {}]
  %s4 = inlined_call_operand.hbm [shape: f32[2,16,32], index: 4, kind: output, shape index: {}]
  %s5 = sld [smem:[#allocation0]]
  $region65: #{_lambda_.1} parent=0
    _
  %s7 = ssub.s32 1, %s5
  %s8 = scalar_select 0, %s7, %s5
  $region1: #{_lambda_.1} parent=0
    #allocation2 [shape = 'u8[8192]{0}', space=vmem, size = 0x2000, scoped, tag = 'input window, operand 0']
    #allocation3 [shape = 's32[2]{0}', space=sflag, size = 0x8, scoped, tag = 'scoped memory for _lambda_.1']
    #allocation4 [shape = 's32[2]{0}', space=sflag, size = 0x8, scoped, tag = 'scoped memory for _lambda_.1']
    #allocation5 [shape = 'u8[16384]{0}', space=vmem, size = 0x4000, scoped, tag = 'input window, operand 1']
    #allocation6 [shape = 's32[2]{0}', space=sflag, size = 0x8, scoped, tag = 'scoped memory for _lambda_.1']
    #allocation7 [shape = 'u8[8192]{0}', space=vmem, size = 0x2000, scoped, tag = 'input window, operand 2, single buffered']
    #allocation8 [shape = 'u8[8192]{0}', space=vmem, size = 0x2000, scoped, tag = 'input window, operand 3, single buffered']
    #allocation9 [shape = 's32[1]{0}', space=sflag, size = 0x4, scoped, tag = 'scoped memory for _lambda_.1']
    #allocation10 [shape = 'u8[8192]{0}', space=vmem, size = 0x2000, scoped, tag = 'output window, operand 0']
    %9 = vsyncpa [#allocation3], 0
    %s10 = scalar_lea.sflag [#allocation3], 1
    %11 = vsyncpa %s10, 0
    %12 = vsyncpa [#allocation6], 0
    %s13 = scalar_lea.sflag [#allocation6], 1
    %14 = vsyncpa %s13, 0
    %15 = vsyncpa [#allocation9], 0
    %16 = vsyncpa [#allocation4], 0
    %s17 = scalar_lea.sflag [#allocation4], 1
    %18 = vsyncpa %s17, 0
    loop: start=0, step=1, limit=6
    $region2: #{_lambda_.1} parent=1 // loop_pre_header
      _
    $region3: #{_lambda_.1} parent=1 // loop_header
      %s20 = sphi 0, %s24
      %p21 = scmp.ge.s32.totalorder %s20, 6
      %s27 = sphi 0, %s39
      %s28 = sphi 0, %s35
      %s29 = sphi 0, %s27
      %s30 = sphi 0, %s28
      %s31 = sphi 0, %s29
      %s32 = sphi 0, %s30
      %s44 = sphi 0, %s46
      %s47 = sphi 0, %s44
      %s48 = sphi 0, %s47
      %s64 = sphi 0, %s48
      %s70 = sphi 0, %s72
      %s73 = sphi 0, %s70
      %s74 = sphi 0, %s73
      %s90 = sphi 0, %s74
      %s94 = sphi 0, %s94
      %s96 = sphi 0, %s94
      %s97 = sphi 0, %s96
      %s111 = sphi 0, %s97
      %s115 = sphi 0, %s115
      %s117 = sphi 0, %s115
      %s118 = sphi 0, %s117
      %s132 = sphi 0, %s118
      %s140 = sphi 0, %s142
      %s143 = sphi 0, %s140
      %s144 = sphi 0, %s143
      %s160 = sphi 0, %s144
    $region4: #{_lambda_.1} parent=1 // loop_header_branch
      %23 = sbr.rel (%p21) target = $region8
    $region5: #{_lambda_.1} parent=1 // loop_body
      %s25 = ssub.s32 %s20, 1
      %s26 = ssub.s32 %s20, 2
      %s33 = sadd.s32 1, %s28
      %p34 = scmp.ge.s32.totalorder %s33, 2
      %s35 = scalar_select %p34, 0, %s33
      %s36 = sadd.s32 1, %s27
      %s37 = scalar_select %p34, %s36, %s27
      %p38 = scmp.ge.s32.totalorder %s37, 2
      %s39 = scalar_select %p38, 0, %s37
      %s40 = ssub.s32 %s27, %s39
      %s41 = ssub.s32 %s28, %s35
      %s42 = sor.u32 %s40, %s41
      %p43 = scmp.eq.s32.totalorder %s42, 0
      %s45 = sadd.s32 %s44, 1
      %s46 = scalar_select %p43, %s44, %s45
      %p49 = pneg %p43
      %p50 = scmp.eq.s32.totalorder %s20, 3
      %p51 = por %p49, %p50
      %p52 = scmp.ne.s32.totalorder %s44, %s47
      %p53 = scmp.eq.s32.totalorder %s20, 0
      %p54 = por %p52, %p53
      %p55 = scmp.ne.s32.totalorder %s44, %s47
      %p56 = scmp.eq.s32.totalorder %s25, 3
      %p57 = por %p55, %p56
      %p58 = scmp.ne.s32.totalorder %s47, %s48
      %p59 = scmp.eq.s32.totalorder %s25, 0
      %p60 = por %p58, %p59
      %p61 = scmp.ne.s32.totalorder %s47, %s48
      %p62 = scmp.eq.s32.totalorder %s26, 3
      %p63 = por %p61, %p62
      %p65 = scmp.ne.s32.totalorder %s48, %s64
      %p66 = scmp.eq.s32.totalorder %s26, 0
      %p67 = por %p65, %p66
      %s68 = ssub.s32 %s27, %s39
      %p69 = scmp.eq.s32.totalorder %s68, 0
      %s71 = sadd.s32 %s70, 1
      %s72 = scalar_select %p69, %s70, %s71
      %p75 = pneg %p69
      %p76 = scmp.eq.s32.totalorder %s20, 3
      %p77 = por %p75, %p76
      %p78 = scmp.ne.s32.totalorder %s70, %s73
      %p79 = scmp.eq.s32.totalorder %s20, 0
      %p80 = por %p78, %p79
      %p81 = scmp.ne.s32.totalorder %s70, %s73
      %p82 = scmp.eq.s32.totalorder %s25, 3
      %p83 = por %p81, %p82
      %p84 = scmp.ne.s32.totalorder %s73, %s74
      %p85 = scmp.eq.s32.totalorder %s25, 0
      %p86 = por %p84, %p85
      %p87 = scmp.ne.s32.totalorder %s73, %s74
      %p88 = scmp.eq.s32.totalorder %s26, 3
      %p89 = por %p87, %p88
      %p91 = scmp.ne.s32.totalorder %s74, %s90
      %p92 = scmp.eq.s32.totalorder %s26, 0
      %p93 = por %p91, %p92
      %s95 = sadd.s32 %s94, 1
      %p98 = scmp.eq.s32.totalorder %s20, 3
      %p99 = scmp.ne.s32.totalorder %s94, %s96
      %p100 = scmp.eq.s32.totalorder %s20, 0
      %p101 = por %p99, %p100
      %p102 = scmp.ne.s32.totalorder %s94, %s96
      %p103 = scmp.eq.s32.totalorder %s25, 3
      %p104 = por %p102, %p103
      %p105 = scmp.ne.s32.totalorder %s96, %s97
      %p106 = scmp.eq.s32.totalorder %s25, 0
      %p107 = por %p105, %p106
      %p108 = scmp.ne.s32.totalorder %s96, %s97
      %p109 = scmp.eq.s32.totalorder %s26, 3
      %p110 = por %p108, %p109
      %p112 = scmp.ne.s32.totalorder %s97, %s111
      %p113 = scmp.eq.s32.totalorder %s26, 0
      %p114 = por %p112, %p113
      %s116 = sadd.s32 %s115, 1
      %p119 = scmp.eq.s32.totalorder %s20, 3
      %p120 = scmp.ne.s32.totalorder %s115, %s117
      %p121 = scmp.eq.s32.totalorder %s20, 0
      %p122 = por %p120, %p121
      %p123 = scmp.ne.s32.totalorder %s115, %s117
      %p124 = scmp.eq.s32.totalorder %s25, 3
      %p125 = por %p123, %p124
      %p126 = scmp.ne.s32.totalorder %s117, %s118
      %p127 = scmp.eq.s32.totalorder %s25, 0
      %p128 = por %p126, %p127
      %p129 = scmp.ne.s32.totalorder %s117, %s118
      %p130 = scmp.eq.s32.totalorder %s26, 3
      %p131 = por %p129, %p130
      %p133 = scmp.ne.s32.totalorder %s118, %s132
      %p134 = scmp.eq.s32.totalorder %s26, 0
      %p135 = por %p133, %p134
      %s136 = ssub.s32 %s27, %s39
      %s137 = ssub.s32 %s28, %s35
      %s138 = sor.u32 %s136, %s137
      %p139 = scmp.eq.s32.totalorder %s138, 0
      %s141 = sadd.s32 %s140, 1
      %s142 = scalar_select %p139, %s140, %s141
      %p145 = pneg %p139
      %p146 = scmp.eq.s32.totalorder %s20, 3
      %p147 = por %p145, %p146
      %p148 = scmp.ne.s32.totalorder %s140, %s143
      %p149 = scmp.eq.s32.totalorder %s20, 0
      %p150 = por %p148, %p149
      %p151 = scmp.ne.s32.totalorder %s140, %s143
      %p152 = scmp.eq.s32.totalorder %s25, 3
      %p153 = por %p151, %p152
      %p154 = scmp.ne.s32.totalorder %s143, %s144
      %p155 = scmp.eq.s32.totalorder %s25, 0
      %p156 = por %p154, %p155
      %p157 = scmp.ne.s32.totalorder %s143, %s144
      %p158 = scmp.eq.s32.totalorder %s26, 3
      %p159 = por %p157, %p158
      %p161 = scmp.ne.s32.totalorder %s144, %s160
      %p162 = scmp.eq.s32.totalorder %s26, 0
      %p163 = por %p161, %p162
      %p164 = scmp.le.s32.totalorder 1, %s20
      %p165 = scmp.lt.s32.totalorder %s20, 5
      %p166 = pnand %p164, %p165
      %p167 = pneg %p166
      // Predicated region
      $region9: #{_lambda_.1} parent=5 // pred_check
        _
      $region10: #{_lambda_.1} parent=5 // pred_check_branch
        %169 = sbr.rel (%p166) target = $region12
      $region11: #{_lambda_.1} parent=5 // pred_region
        %s170 = ssub.s32 %s20, 1
        // Predicated region
        $region13: #{_lambda_.1} parent=11 // pred_check
          %p171 = pneg %p107
        $region14: #{_lambda_.1} parent=11 // pred_check_branch
          %173 = sbr.rel (%p171) target = $region16
        $region15: #{_lambda_.1} parent=11 // pred_region
          %175 = vsyncadd [#allocation6], 0
          %s176 = sshll.u32 %s2, 4
          %s177 = int_to_ptr.hbm [resolvable:$true] %s176
          %s178 = sshll.u32 [#allocation7], 4
          %s179 = int_to_ptr.vmem [resolvable:$true] %s178
          %184 = dma.hbm_to_vmem [thread:$0]  %s177, 256, %s179, [#allocation6], 64, 64, 4
        $region16: #{_lambda_.1} parent=11 // pred_fallthru
          _
        // Predicated region
        $region17: #{_lambda_.1} parent=11 // pred_check
          %p185 = pneg %p128
        $region18: #{_lambda_.1} parent=11 // pred_check_branch
          %187 = sbr.rel (%p185) target = $region20
        $region19: #{_lambda_.1} parent=11 // pred_region
          %189 = vsyncadd [#allocation9], 0
          %s190 = sshll.u32 %s3, 4
          %s191 = int_to_ptr.hbm [resolvable:$true] %s190
          %s192 = sshll.u32 [#allocation8], 4
          %s193 = int_to_ptr.vmem [resolvable:$true] %s192
          %198 = dma.hbm_to_vmem [thread:$0]  %s191, 256, %s193, [#allocation9], 64, 64, 4
        $region20: #{_lambda_.1} parent=11 // pred_fallthru
          _
      $region12: #{_lambda_.1} parent=5 // pred_fallthru
        _
      %p199 = scmp.lt.s32.totalorder %s20, 4
      // Predicated region
      $region21: #{_lambda_.1} parent=5 // pred_check
        %p200 = pneg %p199
      $region22: #{_lambda_.1} parent=5 // pred_check_branch
        %202 = sbr.rel (%p200) target = $region24
      $region23: #{_lambda_.1} parent=5 // pred_region
        // Predicated region
        $region25: #{_lambda_.1} parent=23 // pred_check
          %p203 = pneg %p54
        $region26: #{_lambda_.1} parent=23 // pred_check_branch
          %205 = sbr.rel (%p203) target = $region28
        $region27: #{_lambda_.1} parent=23 // pred_region
          %s206 = sand.u32 %s44, 1
          %s207 = scalar_lea.sflag [#allocation3], %s206
          %s208 = sand.u32 %s44, 1
          %s209 = smul.addr %s208, 8
          %s210 = scalar_lea.vmem [#allocation2], %s209
          %212 = vsyncadd %s207, 0
          %s213 = smul.addr %s27, 2
          %s214 = sadd.s32 %s28, %s213
          %s215 = smul.addr %s214, 8
          %s216 = scalar_lea.hbm %s0, %s215
          %s218 = sshll.u32 %s216, 4
          %s219 = int_to_ptr.hbm [resolvable:$true] %s218
          %s220 = sshll.u32 %s210, 4
          %s221 = int_to_ptr.vmem [resolvable:$true] %s220
          %223 = dma.hbm_to_vmem [thread:$0]  %s219, 128, %s221, %s207
        $region28: #{_lambda_.1} parent=23 // pred_fallthru
          _
        // Predicated region
        $region29: #{_lambda_.1} parent=23 // pred_check
          %p224 = pneg %p80
        $region30: #{_lambda_.1} parent=23 // pred_check_branch
          %226 = sbr.rel (%p224) target = $region32
        $region31: #{_lambda_.1} parent=23 // pred_region
          %s227 = sand.u32 %s20, 1
          %s228 = scalar_lea.sflag [#allocation6], %s227
          %s229 = sand.u32 %s70, 1
          %s230 = smul.addr %s229, 16
          %s231 = scalar_lea.vmem [#allocation5], %s230
          %233 = vsyncadd %s228, 0
          %s234 = smul.addr %s27, 2
          %s235 = smul.addr %s234, 8
          %s236 = scalar_lea.hbm %s1, %s235
          %s237 = sshll.u32 %s236, 4
          %s238 = int_to_ptr.hbm [resolvable:$true] %s237
          %s239 = sshll.u32 %s231, 4
          %s240 = int_to_ptr.vmem [resolvable:$true] %s239
          %245 = dma.hbm_to_vmem [thread:$0]  %s238, 256, %s240, %s228, 128, 128, 8
        $region32: #{_lambda_.1} parent=23 // pred_fallthru
          _
      $region24: #{_lambda_.1} parent=5 // pred_fallthru
        _
      %p246 = scmp.le.s32.totalorder 1, %s20
      %p247 = scmp.lt.s32.totalorder %s20, 5
      %p248 = pnand %p246, %p247
      %p249 = pneg %p248
      // Predicated region
      $region33: #{_lambda_.1} parent=5 // pred_check
        _
      $region34: #{_lambda_.1} parent=5 // pred_check_branch
        %251 = sbr.rel (%p248) target = $region36
      $region35: #{_lambda_.1} parent=5 // pred_region
        %s252 = ssub.s32 %s20, 1
        %s253 = sand.u32 %s47, 1
        %s254 = scalar_lea.sflag [#allocation3], %s253
        %s255 = sand.u32 %s47, 1
        %s256 = smul.addr %s255, 8
        %s257 = scalar_lea.vmem [#allocation2], %s256
        // Predicated region
        $region37: #{_lambda_.1} parent=35 // pred_check
          %p258 = pneg %p60
        $region38: #{_lambda_.1} parent=35 // pred_check_branch
          %260 = sbr.rel (%p258) target = $region40
        $region39: #{_lambda_.1} parent=35 // pred_region
          %262 = dma.done %s254, 128
        $region40: #{_lambda_.1} parent=35 // pred_fallthru
          _
        %s263 = sand.u32 %s25, 1
        %s264 = scalar_lea.sflag [#allocation6], %s263
        %s265 = sand.u32 %s73, 1
        %s266 = smul.addr %s265, 16
        %s267 = scalar_lea.vmem [#allocation5], %s266
        // Predicated region
        $region41: #{_lambda_.1} parent=35 // pred_check
          %p268 = pneg %p86
        $region42: #{_lambda_.1} parent=35 // pred_check_branch
          %270 = sbr.rel (%p268) target = $region44
        $region43: #{_lambda_.1} parent=35 // pred_region
          %272 = dma.done %s264, 256
        $region44: #{_lambda_.1} parent=35 // pred_fallthru
          _
        // Predicated region
        $region45: #{_lambda_.1} parent=35 // pred_check
          %p273 = pneg %p107
        $region46: #{_lambda_.1} parent=35 // pred_check_branch
          %275 = sbr.rel (%p273) target = $region48
        $region47: #{_lambda_.1} parent=35 // pred_region
          %277 = dma.done [#allocation6], 256
        $region48: #{_lambda_.1} parent=35 // pred_fallthru
          _
        // Predicated region
        $region49: #{_lambda_.1} parent=35 // pred_check
          %p278 = pneg %p128
        $region50: #{_lambda_.1} parent=35 // pred_check_branch
          %280 = sbr.rel (%p278) target = $region52
        $region51: #{_lambda_.1} parent=35 // pred_region
          %282 = dma.done [#allocation9], 256
        $region52: #{_lambda_.1} parent=35 // pred_fallthru
          _
        %s283 = sand.u32 %s47, 1
        %s284 = scalar_lea.sflag [#allocation3], %s283
        %s285 = sand.u32 %s47, 1
        %s286 = smul.addr %s285, 8
        %s287 = scalar_lea.vmem [#allocation2], %s286
        %p288 = pneg %p60
        %p289 = pneg %p57
        %s290 = sand.u32 %s25, 1
        %s291 = scalar_lea.sflag [#allocation6], %s290
        %s292 = sand.u32 %s73, 1
        %s293 = smul.addr %s292, 16
        %s294 = scalar_lea.vmem [#allocation5], %s293
        %p295 = pneg %p86
        %p296 = pneg %p83
        %p297 = pneg %p107
        %p298 = pneg %p104
        %p299 = pneg %p128
        %p300 = pneg %p125
        %p301 = pneg %p156
        %p302 = pneg %p153
        %s303 = sand.u32 %s143, 1
        %s304 = scalar_lea.sflag [#allocation4], %s303
        %s305 = sand.u32 %s143, 1
        %s306 = smul.addr %s305, 8
        %s307 = scalar_lea.vmem [#allocation10], %s306
        %v309 = vld [vmem:[#allocation7] sm:$0xf]
        %v310 = vld [vmem:[#allocation7 + $0x4] sm:$0xf]
        %v311 = vld [vmem:[#allocation7 + $0x8] sm:$0xf]
        %v312 = vld [vmem:[#allocation7 + $0xc] sm:$0xf]
        %v313 = vld [vmem:[%s257] sm:$0xff]
        %v314 = vpack.c.bf16 %v313, %v313
        %v319 = vunpack.c.l.b16 %v309
        %v320 = vunpack.c.l.b16 %v310
        %v321 = vunpack.c.l.b16 %v311
        %v322 = vunpack.c.l.b16 %v312
        %v323 = vpack.c.b16 %v320, %v319
        %v324 = vpack.c.b16 %v322, %v321
        %vm327 = vcmask 261120
        %v329 = vsel %vm327, %v314, 0
        %331 = vmatpush.bf16.msra.mxu0 0
        %332 = vmatpush.bf16.msra.mxu0 0
        %333 = vmatpush.bf16.msra.mxu0 0
        %334 = vmatpush.bf16.msra.mxu0 0
        %335 = vmatpush.bf16.msra.mxu0 0
        %336 = vmatpush.bf16.msra.mxu0 0
        %337 = vmatpush.bf16.msra.mxu0 %v324
        %338 = vmatpush.bf16.msra.mxu0 %v323
        %339 = vmatmul.bf16.gmra.mxu0 %v329
        %v340 = vpop.f32.mrf.mxu0
        %v341 = vadd.f32 0.0, %v340
        %v342 = vpop.f32.mrf.mxu0
        %343 = vdwg.mxu0
        %v344 = vld [vmem:[%s267] sm:$0xff]
        %v345 = vld [vmem:[%s267 + $0x8] sm:$0xff]
        %v346 = vpack.c.bf16 %v345, %v344
        %347 = vrot.lane.b32.xlu0 %v323, 96
        %v348 = vpop.permute.xlu0 %347
        %349 = vrot.lane.b32.xlu0 %v324, 96
        %v350 = vpop.permute.xlu0 %349
        %v354 = vsel %vm327, %v346, 0
        %356 = vmatpush.bf16.msra.mxu0 0
        %357 = vmatpush.bf16.msra.mxu0 0
        %358 = vmatpush.bf16.msra.mxu0 0
        %359 = vmatpush.bf16.msra.mxu0 0
        %360 = vmatpush.bf16.msra.mxu0 0
        %361 = vmatpush.bf16.msra.mxu0 0
        %362 = vmatpush.bf16.msra.mxu0 %v350
        %363 = vmatpush.bf16.msra.mxu0 %v348
        %364 = vmatmul.bf16.gmra.mxu0 %v354
        %v365 = vpop.f32.mrf.mxu0
        %v366 = vadd.f32 0.0, %v365
        %v367 = vpop.f32.mrf.mxu0
        %v368 = vadd.f32 0.0, %v367
        %369 = vdwg.mxu0
        %s370 = smul.u32 %s30, 8
        %v371 = vlaneseq
        %v372 = vshrl.u32 %v371, 7
        %v373 = vstv %s370
        %v374 = vadd.s32 %v372, %v373
        %v375 = vlaneseq
        %v376 = vand.u32 %v375, 127
        %vm377 = vcmp.gt.s32.totalorder %v376, %v374
        %v378 = vsel %vm377, -1e+30, 0.0
        %v379 = vmul.f32 %v341, 0.35355338
        %v380 = vpack.c.bf16 %v379, %v379
        %v381 = vpack.c.bf16 %v368, %v366
        %vm382 = vcmask 64512
        %v384 = vsel %vm382, %v380, 0
        %v387 = vsel %vm382, %v381, 0
        %389 = vmatpush.bf16.xpose.msra.mxu0 0
        %390 = vmatpush.bf16.xpose.msra.mxu0 0
        %391 = vmatpush.bf16.xpose.msra.mxu0 0
        %392 = vmatpush.bf16.xpose.msra.mxu0 0
        %393 = vmatpush.bf16.xpose.msra.mxu0 0
        %394 = vmatpush.bf16.xpose.msra.mxu0 0
        %395 = vmatpush.bf16.xpose.msra.mxu0 0
        %396 = vmatpush.bf16.xpose.msra.mxu0 %v387
        %397 = vmatmul.bf16.gmra.mxu0 %v384
        %v398 = vpop.f32.mrf.mxu0
        %v399 = vadd.f32 %v378, %v398
        %v400 = vpop.f32.mrf.mxu0
        %401 = vdwg.mxu0
        %vm402 = vcmask 130048
        %v403 = vsel %vm402, %v399, -inf
        %404 = vmax.xlane.f32.xlu0 %v403
        %v405 = vpop.xlane.xlu0 %404
        %v406 = vsub.f32 %v399, %v405
        %v407 = vmul.f32 %v406, 1.442695
        %v408 = vpow.pop %v407
        %v409 = vsel %vm402, %v408, 0.0
        %410 = vadd.xlane.f32.xlu0 %v409
        %v411 = vpop.xlane.xlu0 %410
        %v412 = vpack.c.bf16 %v408, %v408
        %414 = vrot.lane.b32.xlu0 %v381, 96
        %v415 = vpop.permute.xlu0 %414
        %v418 = vsel %vm402, %v412, 0
        %420 = vmatpush.bf16.msra.mxu0 0
        %421 = vmatpush.bf16.msra.mxu0 0
        %422 = vmatpush.bf16.msra.mxu0 0
        %423 = vmatpush.bf16.msra.mxu0 0
        %424 = vmatpush.bf16.msra.mxu0 0
        %425 = vmatpush.bf16.msra.mxu0 0
        %426 = vmatpush.bf16.msra.mxu0 0
        %427 = vmatpush.bf16.msra.mxu0 %v415
        %428 = vmatmul.bf16.gmra.mxu0 %v418
        %v429 = vpop.f32.mrf.mxu0
        %v430 = vadd.f32 0.0, %v429
        %v431 = vpop.f32.mrf.mxu0
        %432 = vdwg.mxu0
        %v433 = vrcp.pop %v411
        %v434 = vmul.f32 %v430, %v433
        %436 = vrot.lane.b32.xlu0 %v380, 120
        %v437 = vpop.permute.xlu0 %436
        %438 = vrot.lane.b32.xlu0 %v381, 120
        %v439 = vpop.permute.xlu0 %438
        %v441 = vsel %vm382, %v437, 0
        %v444 = vsel %vm382, %v439, 0
        %446 = vmatpush.bf16.xpose.msra.mxu0 0
        %447 = vmatpush.bf16.xpose.msra.mxu0 0
        %448 = vmatpush.bf16.xpose.msra.mxu0 0
        %449 = vmatpush.bf16.xpose.msra.mxu0 0
        %450 = vmatpush.bf16.xpose.msra.mxu0 0
        %451 = vmatpush.bf16.xpose.msra.mxu0 0
        %452 = vmatpush.bf16.xpose.msra.mxu0 0
        %453 = vmatpush.bf16.xpose.msra.mxu0 %v444
        %454 = vmatmul.bf16.gmra.mxu0 %v441
        %v455 = vpop.f32.mrf.mxu0
        %v456 = vadd.f32 %v378, %v455
        %v457 = vpop.f32.mrf.mxu0
        %458 = vdwg.mxu0
        %v459 = vsel %vm402, %v456, -inf
        %460 = vmax.xlane.f32.xlu0 %v459
        %v461 = vpop.xlane.xlu0 %460
        %v462 = vsub.f32 %v456, %v461
        %v463 = vmul.f32 %v462, 1.442695
        %v464 = vpow.pop %v463
        %v465 = vsel %vm402, %v464, 0.0
        %466 = vadd.xlane.f32.xlu0 %v465
        %v467 = vpop.xlane.xlu0 %466
        %v468 = vpack.c.bf16 %v464, %v464
        %469 = vrot.lane.b32.xlu0 %v381, 88
        %v470 = vpop.permute.xlu0 %469
        %v473 = vsel %vm402, %v468, 0
        %475 = vmatpush.bf16.msra.mxu0 0
        %476 = vmatpush.bf16.msra.mxu0 0
        %477 = vmatpush.bf16.msra.mxu0 0
        %478 = vmatpush.bf16.msra.mxu0 0
        %479 = vmatpush.bf16.msra.mxu0 0
        %480 = vmatpush.bf16.msra.mxu0 0
        %481 = vmatpush.bf16.msra.mxu0 0
        %482 = vmatpush.bf16.msra.mxu0 %v470
        %483 = vmatmul.bf16.gmra.mxu0 %v473
        %v484 = vpop.f32.mrf.mxu0
        %v485 = vadd.f32 0.0, %v484
        %v486 = vpop.f32.mrf.mxu0
        %487 = vdwg.mxu0
        %v488 = vrcp.pop %v467
        %v489 = vmul.f32 %v485, %v488
        %490 = vrot.lane.b32.xlu0 %v380, 112
        %v491 = vpop.permute.xlu0 %490
        %492 = vrot.lane.b32.xlu0 %v381, 112
        %v493 = vpop.permute.xlu0 %492
        %v495 = vsel %vm382, %v491, 0
        %v498 = vsel %vm382, %v493, 0
        %500 = vmatpush.bf16.xpose.msra.mxu0 0
        %501 = vmatpush.bf16.xpose.msra.mxu0 0
        %502 = vmatpush.bf16.xpose.msra.mxu0 0
        %503 = vmatpush.bf16.xpose.msra.mxu0 0
        %504 = vmatpush.bf16.xpose.msra.mxu0 0
        %505 = vmatpush.bf16.xpose.msra.mxu0 0
        %506 = vmatpush.bf16.xpose.msra.mxu0 0
        %507 = vmatpush.bf16.xpose.msra.mxu0 %v498
        %508 = vmatmul.bf16.gmra.mxu0 %v495
        %v509 = vpop.f32.mrf.mxu0
        %v510 = vadd.f32 %v378, %v509
        %v511 = vpop.f32.mrf.mxu0
        %512 = vdwg.mxu0
        %v513 = vsel %vm402, %v510, -inf
        %514 = vmax.xlane.f32.xlu0 %v513
        %v515 = vpop.xlane.xlu0 %514
        %v516 = vsub.f32 %v510, %v515
        %v517 = vmul.f32 %v516, 1.442695
        %v518 = vpow.pop %v517
        %v519 = vsel %vm402, %v518, 0.0
        %520 = vadd.xlane.f32.xlu0 %v519
        %v521 = vpop.xlane.xlu0 %520
        %v522 = vpack.c.bf16 %v518, %v518
        %523 = vrot.lane.b32.xlu0 %v381, 80
        %v524 = vpop.permute.xlu0 %523
        %v527 = vsel %vm402, %v522, 0
        %529 = vmatpush.bf16.msra.mxu0 0
        %530 = vmatpush.bf16.msra.mxu0 0
        %531 = vmatpush.bf16.msra.mxu0 0
        %532 = vmatpush.bf16.msra.mxu0 0
        %533 = vmatpush.bf16.msra.mxu0 0
        %534 = vmatpush.bf16.msra.mxu0 0
        %535 = vmatpush.bf16.msra.mxu0 0
        %536 = vmatpush.bf16.msra.mxu0 %v524
        %537 = vmatmul.bf16.gmra.mxu0 %v527
        %v538 = vpop.f32.mrf.mxu0
        %v539 = vadd.f32 0.0, %v538
        %v540 = vpop.f32.mrf.mxu0
        %541 = vdwg.mxu0
        %v542 = vrcp.pop %v521
        %v543 = vmul.f32 %v539, %v542
        %544 = vrot.lane.b32.xlu0 %v380, 104
        %v545 = vpop.permute.xlu0 %544
        %546 = vrot.lane.b32.xlu0 %v381, 104
        %v547 = vpop.permute.xlu0 %546
        %v549 = vsel %vm382, %v545, 0
        %v552 = vsel %vm382, %v547, 0
        %554 = vmatpush.bf16.xpose.msra.mxu0 0
        %555 = vmatpush.bf16.xpose.msra.mxu0 0
        %556 = vmatpush.bf16.xpose.msra.mxu0 0
        %557 = vmatpush.bf16.xpose.msra.mxu0 0
        %558 = vmatpush.bf16.xpose.msra.mxu0 0
        %559 = vmatpush.bf16.xpose.msra.mxu0 0
        %560 = vmatpush.bf16.xpose.msra.mxu0 0
        %561 = vmatpush.bf16.xpose.msra.mxu0 %v552
        %562 = vmatmul.bf16.gmra.mxu0 %v549
        %v563 = vpop.f32.mrf.mxu0
        %v564 = vadd.f32 %v378, %v563
        %v565 = vpop.f32.mrf.mxu0
        %566 = vdwg.mxu0
        %v567 = vsel %vm402, %v564, -inf
        %568 = vmax.xlane.f32.xlu0 %v567
        %v569 = vpop.xlane.xlu0 %568
        %v570 = vsub.f32 %v564, %v569
        %v571 = vmul.f32 %v570, 1.442695
        %v572 = vpow.pop %v571
        %v573 = vsel %vm402, %v572, 0.0
        %574 = vadd.xlane.f32.xlu0 %v573
        %v575 = vpop.xlane.xlu0 %574
        %v576 = vpack.c.bf16 %v572, %v572
        %577 = vrot.lane.b32.xlu0 %v381, 72
        %v578 = vpop.permute.xlu0 %577
        %v581 = vsel %vm402, %v576, 0
        %583 = vmatpush.bf16.msra.mxu0 0
        %584 = vmatpush.bf16.msra.mxu0 0
        %585 = vmatpush.bf16.msra.mxu0 0
        %586 = vmatpush.bf16.msra.mxu0 0
        %587 = vmatpush.bf16.msra.mxu0 0
        %588 = vmatpush.bf16.msra.mxu0 0
        %589 = vmatpush.bf16.msra.mxu0 0
        %590 = vmatpush.bf16.msra.mxu0 %v578
        %591 = vmatmul.bf16.gmra.mxu0 %v581
        %v592 = vpop.f32.mrf.mxu0
        %v593 = vadd.f32 0.0, %v592
        %v594 = vpop.f32.mrf.mxu0
        %595 = vdwg.mxu0
        %v596 = vrcp.pop %v575
        %v597 = vmul.f32 %v593, %v596
        %599 = vrot.lane.b32.xlu0 %v489, 8
        %v600 = vpop.permute.xlu0 %599
        %603 = vrot.lane.b32.xlu0 %v543, 16
        %v604 = vpop.permute.xlu0 %603
        %607 = vrot.lane.b32.xlu0 %v597, 24
        %v608 = vpop.permute.xlu0 %607
        %v610 = vsel %vm382, %v434, %v600
        %v611 = vsel %vm402, %v610, %v604
        %vm612 = vcmask 195584
        %v613 = vsel %vm612, %v611, %v608
        %v614 = vpack.c.bf16 %v613, %v613
        %v615 = vld [vmem:[#allocation8] sm:$0xf]
        %v616 = vld [vmem:[#allocation8 + $0x4] sm:$0xf]
        %v617 = vld [vmem:[#allocation8 + $0x8] sm:$0xf]
        %v618 = vld [vmem:[#allocation8 + $0xc] sm:$0xf]
        %v623 = vunpack.c.l.b16 %v615
        %v624 = vunpack.c.l.b16 %v616
        %v625 = vunpack.c.l.b16 %v617
        %v626 = vunpack.c.l.b16 %v618
        %v627 = vpack.c.b16 %v624, %v623
        %v628 = vpack.c.b16 %v626, %v625
        %v632 = vsel %vm327, %v614, 0
        %634 = vmatpush.bf16.msra.mxu0 0
        %635 = vmatpush.bf16.msra.mxu0 0
        %636 = vmatpush.bf16.msra.mxu0 0
        %637 = vmatpush.bf16.msra.mxu0 0
        %638 = vmatpush.bf16.msra.mxu0 0
        %639 = vmatpush.bf16.msra.mxu0 0
        %640 = vmatpush.bf16.msra.mxu0 %v628
        %641 = vmatpush.bf16.msra.mxu0 %v627
        %642 = vmatmul.bf16.gmra.mxu0 %v632
        %v643 = vpop.f32.mrf.mxu0
        %v644 = vadd.f32 0.0, %v643
        %v645 = vpop.f32.mrf.mxu0
        %646 = vdwg.mxu0
        %647 = vst.msk [vmem:[%s307] sm:$0xff] %vm327, %v644
        %s648 = sand.u32 %s143, 1
        %s649 = scalar_lea.sflag [#allocation4], %s648
        %s650 = sand.u32 %s143, 1
        %s651 = smul.addr %s650, 8
        %s652 = scalar_lea.vmem [#allocation10], %s651
        // Predicated region
        $region53: #{_lambda_.1} parent=35 // pred_check
          %p653 = pneg %p153
        $region54: #{_lambda_.1} parent=35 // pred_check_branch
          %655 = sbr.rel (%p653) target = $region56
        $region55: #{_lambda_.1} parent=35 // pred_region
          %657 = vsyncadd %s649, 0
          %s658 = smul.addr %s29, 2
          %s659 = sadd.s32 %s30, %s658
          %s660 = smul.addr %s659, 8
          %s661 = scalar_lea.hbm %s4, %s660
          %s663 = sshll.u32 %s652, 4
          %s664 = int_to_ptr.vmem [resolvable:$true] %s663
          %s665 = sshll.u32 %s661, 4
          %s666 = int_to_ptr.hbm [resolvable:$true] %s665
          %668 = dma.vmem_to_hbm [thread:$0]  %s664, 128, %s666, %s649
        $region56: #{_lambda_.1} parent=35 // pred_fallthru
          _
      $region36: #{_lambda_.1} parent=5 // pred_fallthru
        _
      %p669 = scmp.le.s32.totalorder 2, %s20
      // Predicated region
      $region57: #{_lambda_.1} parent=5 // pred_check
        %p670 = pneg %p669
      $region58: #{_lambda_.1} parent=5 // pred_check_branch
        %672 = sbr.rel (%p670) target = $region60
      $region59: #{_lambda_.1} parent=5 // pred_region
        %s673 = ssub.s32 %s20, 2
        // Predicated region
        $region61: #{_lambda_.1} parent=59 // pred_check
          %p674 = pneg %p159
        $region62: #{_lambda_.1} parent=59 // pred_check_branch
          %676 = sbr.rel (%p674) target = $region64
        $region63: #{_lambda_.1} parent=59 // pred_region
          %s677 = sand.u32 %s144, 1
          %s678 = scalar_lea.sflag [#allocation4], %s677
          %s679 = sand.u32 %s144, 1
          %s680 = smul.addr %s679, 8
          %s681 = scalar_lea.vmem [#allocation10], %s680
          %683 = dma.done %s678, 128
        $region64: #{_lambda_.1} parent=59 // pred_fallthru
          _
      $region60: #{_lambda_.1} parent=5 // pred_fallthru
        _
    $region6: #{_lambda_.1} parent=1 // loop_footer
      %s24 = sadd.s32 1, %s20
    $region7: #{_lambda_.1} parent=1 // loop_footer_branch
      %19 = sbr.rel target = $region3
    $region8: #{_lambda_.1} parent=1 // loop_exit
      _
    %684 = vsyncpa [#allocation3], 1
    %s685 = scalar_lea.sflag [#allocation3], 1
    %686 = vsyncpa %s685, 1
    %687 = vsyncpa [#allocation6], 1
    %s688 = scalar_lea.sflag [#allocation6], 1
    %689 = vsyncpa %s688, 1
    %690 = vsyncpa [#allocation9], 1
    %691 = vsyncpa [#allocation4], 1
    %s692 = scalar_lea.sflag [#allocation4], 1
    %693 = vsyncpa %s692, 1

</llo_original>
